<compile_context>
chip_gen: v6e
topology: v6e:2x2x1
jax: 0.10.0
libtpu: 0.0.40
codegen_flags: <defaults>
</compile_context>

<pallas_src>
import functools

import jax
import jax.numpy as jnp
from jax.experimental import pallas as pl
from jax.experimental.pallas import tpu as pltpu


LANE = 128
SUBLANE = 8


def _round_up(x, m):
    return ((x + m - 1) // m) * m


def _cdiv(a, b):
    return -(-a // b)


def _leaky_relu(x, slope=0.2):
    return jnp.where(x > 0, x, slope * x)


def _hidden_stack(x_ref, w1_ref, b1_ref, w2_ref, b2_ref, w3_ref, b3_ref):
    """Three fused (Linear + LeakyReLU) layers.

    Matmul inputs are bf16 (MXU native rate), accumulation is f32; bias add and
    LeakyReLU are done in f32 on the VPU.  Returns the f32 activations of the
    third hidden layer, shape (tm, K3_padded).
    """
    h = x_ref[...].astype(jnp.bfloat16)

    h = jnp.dot(h, w1_ref[...], preferred_element_type=jnp.float32) + b1_ref[...]
    h = _leaky_relu(h)

    h = jnp.dot(h.astype(jnp.bfloat16), w2_ref[...],
                preferred_element_type=jnp.float32) + b2_ref[...]
    h = _leaky_relu(h)

    h = jnp.dot(h.astype(jnp.bfloat16), w3_ref[...],
                preferred_element_type=jnp.float32) + b3_ref[...]
    return _leaky_relu(h)


def generator_kernel_narrow(x_ref,
                            w1_ref, b1_ref,
                            w2_ref, b2_ref,
                            w3_ref, b3_ref,
                            w4_ref, b4_ref,
                            o_ref):
    """output_dim == 1 path.

    Final Linear is a VPU broadcast-multiply + lane reduction against the
    (1, K3) weight row (zero-padded lanes contribute exactly 0), producing a
    true (tm, 1) column that is written as-is — 4 B/row of HBM write instead of
    the previous 512 B/row padded block.
    """
    h = _hidden_stack(x_ref, w1_ref, b1_ref, w2_ref, b2_ref, w3_ref, b3_ref)
    col = jnp.sum(h * w4_ref[...], axis=-1, keepdims=True)      # (tm, 1) f32
    o_ref[...] = (col + b4_ref[...]).astype(o_ref.dtype)


def generator_kernel_wide(x_ref,
                          w1_ref, b1_ref,
                          w2_ref, b2_ref,
                          w3_ref, b3_ref,
                          w4_ref, b4_ref,
                          o_ref):
    """Generic output_dim > 1 fallback: padded MXU final layer, bf16 store."""
    h = _hidden_stack(x_ref, w1_ref, b1_ref, w2_ref, b2_ref, w3_ref, b3_ref)
    h = jnp.dot(h.astype(jnp.bfloat16), w4_ref[...],
                preferred_element_type=jnp.float32) + b4_ref[...]
    o_ref[...] = h.astype(o_ref.dtype)


def prepare_generator_params(params, input_dim):
    """Pad feature dims to 128 lanes and cast weights to bf16 — done ONCE.

    params: list of 4 (W, b) with W of shape (in_features, out_features)
            (i.e. the transpose of PyTorch's nn.Linear weight).
    Returns a flat tuple (w1, b1, ..., w4, b4) for `generator_forward`.

    Hidden layers: bf16 weights padded to 128-lane widths, f32 bias rows.
    Final layer:
      * output_dim == 1: f32 row-vector weight (1, K3_padded) and (1, 1) f32
        bias for the in-kernel VPU reduction (no 128x padded matmul).
      * output_dim  > 1: padded bf16 weight / f32 bias like the hidden layers.
    Zero-padded weight rows/cols and zero bias lanes keep padded lanes exactly
    0 through bias + LeakyReLU, so no garbage leaks into the real outputs.
    """
    assert len(params) == 4, "Generator has exactly four Linear layers"
    dims = [input_dim] + [w.shape[1] for (w, _) in params]
    output_dim = dims[-1]
    pdims = [input_dim] + [_round_up(d, LANE) for d in dims[1:-1]]

    flat = []
    for i in range(3):
        w, b = params[i]
        kin, kout = pdims[i], pdims[i + 1]
        w_p = jnp.zeros((kin, kout), jnp.bfloat16)
        w_p = w_p.at[:w.shape[0], :w.shape[1]].set(w.astype(jnp.bfloat16))
        b_p = jnp.zeros((1, kout), jnp.float32)
        b_p = b_p.at[0, :b.shape[0]].set(b.astype(jnp.float32))
        flat.extend([w_p, b_p])

    w, b = params[3]
    kin = pdims[-1]
    if output_dim == 1:
        w_p = jnp.zeros((1, kin), jnp.float32)
        w_p = w_p.at[0, :w.shape[0]].set(w[:, 0].astype(jnp.float32))
        b_p = b.astype(jnp.float32).reshape(1, 1)
    else:
        kout = _round_up(output_dim, LANE)
        w_p = jnp.zeros((kin, kout), jnp.bfloat16)
        w_p = w_p.at[:w.shape[0], :w.shape[1]].set(w.astype(jnp.bfloat16))
        b_p = jnp.zeros((1, kout), jnp.float32)
        b_p = b_p.at[0, :b.shape[0]].set(b.astype(jnp.float32))
    flat.extend([w_p, b_p])
    return tuple(flat)


def _derive_tile(n, block_m):
    """Batch tile: multiple of 8 sublanes, <= block_m, and >= 2 grid steps
    whenever the (padded) batch allows it so both v7x TensorCores get work."""
    n8 = _round_up(n, SUBLANE)
    tm = min(block_m, n8)
    if n8 > SUBLANE:
        tm = min(tm, _round_up(_cdiv(n8, 2), SUBLANE))
    tm = max(SUBLANE, _round_up(tm, SUBLANE))
    n_pad = _round_up(n8, tm)
    return tm, n_pad


@functools.partial(jax.jit,
                   static_argnames=("input_dim", "output_dim", "block_m"))
def generator_forward(noise, padded_params, *, input_dim, output_dim,
                      block_m=2048):
    """Pallas forward pass equivalent to Generator.forward(noise)."""
    n = noise.shape[0]
    x = noise.reshape(n, input_dim).astype(jnp.float32)

    tm, n_pad = _derive_tile(n, block_m)
    if n_pad != n:
        x = jnp.pad(x, ((0, n_pad - n), (0, 0)))

    grid = (n_pad // tm,)

    in_specs = [pl.BlockSpec((tm, input_dim), lambda i: (i, 0))]
    for p in padded_params:
        # Constant block index -> weights/biases stay VMEM-resident across steps.
        in_specs.append(pl.BlockSpec(p.shape, lambda i: (0, 0)))

    if output_dim == 1:
        kernel = generator_kernel_narrow
        out_cols = 1
        out_dtype = jnp.float32          # 4 B/row: negligible, keep full prec.
    else:
        kernel = generator_kernel_wide
        out_cols = padded_params[-2].shape[1]   # w4's padded output width
        out_dtype = jnp.bfloat16         # halves the padded write stream

    out = pl.pallas_call(
        kernel,
        out_shape=jax.ShapeDtypeStruct((n_pad, out_cols), out_dtype),
        grid=grid,
        in_specs=in_specs,
        out_specs=pl.BlockSpec((tm, out_cols), lambda i: (i, 0)),
        compiler_params=pltpu.CompilerParams(
            dimension_semantics=("parallel",),       # shards across v7x's 2 TCs
            vmem_limit_bytes=32 * 1024 * 1024,       # safe on v5e/v6e/v7x
        ),
    )(x, *padded_params)

    if output_dim == 1:
        return out[:n]                               # already (n, 1) f32
    return out[:n, :output_dim].astype(jnp.float32)


def init_generator_params(key, input_dim=10, output_dim=1, hidden_dim=64):
    """Deterministic PyTorch-style uniform(-1/sqrt(fan_in), 1/sqrt(fan_in)).

    Returns a list of (W, b) with W of shape (in_features, out_features)."""
    layer_dims = [(input_dim, hidden_dim),
                  (hidden_dim, hidden_dim * 2),
                  (hidden_dim * 2, hidden_dim * 4),
                  (hidden_dim * 4, output_dim)]
    params = []
    for (fin, fout) in layer_dims:
        key, kw, kb = jax.random.split(key, 3)
        bound = 1.0 / (fin ** 0.5)
        w = jax.random.uniform(kw, (fin, fout), jnp.float32, -bound, bound)
        b = jax.random.uniform(kb, (fout,), jnp.float32, -bound, bound)
        params.append((w, b))
    return params


def generator_reference(noise, params, input_dim):
    """Pure-JAX f32 reference (mirrors the PyTorch module exactly)."""
    x = noise.reshape(noise.shape[0], input_dim).astype(jnp.float32)
    for i, (w, b) in enumerate(params):
        x = x @ w + b
        if i < len(params) - 1:
            x = jnp.where(x > 0, x, 0.2 * x)
    return x


if __name__ == "__main__":
    # Small shapes consistent with the module's forward: noise (n, input_dim).
    batch = 8
    input_dim = 10
    output_dim = 1
    hidden_dim = 32

    key = jax.random.PRNGKey(0)
    (key_noise, key_params, key_noise2,
     key_params_w, key_noise3) = jax.random.split(key, 5)

    noise = jax.random.normal(key_noise, (batch, input_dim), jnp.float32)
    params = init_generator_params(key_params, input_dim, output_dim, hidden_dim)
    padded = prepare_generator_params(params, input_dim)

    # --- demo-sized batch (single grid step, narrow output path) ---
    out = generator_forward(noise, padded,
                            input_dim=input_dim, output_dim=output_dim)
    out = jax.block_until_ready(out)
    ref = generator_reference(noise, params, input_dim)
    assert out.shape == (batch, output_dim), out.shape
    # bf16 matmul inputs (f32 accumulation) -> loosened tolerance vs f32 ref.
    assert jnp.allclose(out, ref, atol=3e-2, rtol=3e-2), \
        f"max abs err {jnp.max(jnp.abs(out - ref))}"

    # --- multi-tile batch exercising the grid + trailing-block padding ---
    batch2 = 600
    noise2 = jax.random.normal(key_noise2, (batch2, input_dim), jnp.float32)
    out2 = generator_forward(noise2, padded,
                             input_dim=input_dim, output_dim=output_dim,
                             block_m=256)
    out2 = jax.block_until_ready(out2)
    ref2 = generator_reference(noise2, params, input_dim)
    assert out2.shape == (batch2, output_dim), out2.shape
    assert jnp.allclose(out2, ref2, atol=3e-2, rtol=3e-2), \
        f"max abs err {jnp.max(jnp.abs(out2 - ref2))}"

    # --- generic output_dim > 1 fallback (padded matmul, bf16 store) ---
    out_dim_w = 4
    params_w = init_generator_params(key_params_w, input_dim, out_dim_w, 16)
    padded_w = prepare_generator_params(params_w, input_dim)
    noise3 = jax.random.normal(key_noise3, (16, input_dim), jnp.float32)
    out3 = generator_forward(noise3, padded_w,
                             input_dim=input_dim, output_dim=out_dim_w)
    out3 = jax.block_until_ready(out3)
    ref3 = generator_reference(noise3, params_w, input_dim)
    assert out3.shape == (16, out_dim_w), out3.shape
    assert jnp.allclose(out3, ref3, atol=3e-2, rtol=3e-2), \
        f"max abs err {jnp.max(jnp.abs(out3 - ref3))}"

    print("KERNEL_OK")
</pallas_src>

<mosaic_0001>
module attributes {stable_mosaic.version = 11 : i64} {
  func.func @generator_kernel_narrow(%arg0: i32, %arg1: memref<8x10xf32, #tpu.memory_space<vmem>>, %arg2: memref<10x128xbf16, #tpu.memory_space<vmem>>, %arg3: memref<1x128xf32, #tpu.memory_space<vmem>>, %arg4: memref<128x128xbf16, #tpu.memory_space<vmem>>, %arg5: memref<1x128xf32, #tpu.memory_space<vmem>>, %arg6: memref<128x128xbf16, #tpu.memory_space<vmem>>, %arg7: memref<1x128xf32, #tpu.memory_space<vmem>>, %arg8: memref<1x128xf32, #tpu.memory_space<vmem>>, %arg9: memref<1x1xf32, #tpu.memory_space<vmem>>, %arg10: memref<8x1xf32, #tpu.memory_space<vmem>>) attributes {dimension_semantics = [#tpu.dimension_semantics<parallel>], iteration_bounds = array<i64: 1>, scalar_prefetch = 0 : i64, scratch_operands = 0 : i64, tpu.core_type = #tpu.core_type<tc>, window_params = [{transform_indices = @transform_0, window_bounds = array<i64: 8, 10>}, {pipeline_mode = #tpu.pipeline_mode<synchronous>, transform_indices = @transform_1, window_bounds = array<i64: 10, 128>}, {pipeline_mode = #tpu.pipeline_mode<synchronous>, transform_indices = @transform_2, window_bounds = array<i64: 1, 128>}, {pipeline_mode = #tpu.pipeline_mode<synchronous>, transform_indices = @transform_3, window_bounds = array<i64: 128, 128>}, {pipeline_mode = #tpu.pipeline_mode<synchronous>, transform_indices = @transform_4, window_bounds = array<i64: 1, 128>}, {pipeline_mode = #tpu.pipeline_mode<synchronous>, transform_indices = @transform_5, window_bounds = array<i64: 128, 128>}, {pipeline_mode = #tpu.pipeline_mode<synchronous>, transform_indices = @transform_6, window_bounds = array<i64: 1, 128>}, {pipeline_mode = #tpu.pipeline_mode<synchronous>, transform_indices = @transform_7, window_bounds = array<i64: 1, 128>}, {pipeline_mode = #tpu.pipeline_mode<synchronous>, transform_indices = @transform_8, window_bounds = array<i64: 1, 1>}, {transform_indices = @transform_9, window_bounds = array<i64: 8, 1>}]} {
    %c0 = arith.constant 0 : index
    %c0_0 = arith.constant 0 : index
    %0 = vector.load %arg1[%c0, %c0_0] : memref<8x10xf32, #tpu.memory_space<vmem>>, vector<8x10xf32>
    %1 = arith.truncf %0 : vector<8x10xf32> to vector<8x10xbf16>
    %c0_1 = arith.constant 0 : index
    %c0_2 = arith.constant 0 : index
    %2 = vector.load %arg2[%c0_1, %c0_2] : memref<10x128xbf16, #tpu.memory_space<vmem>>, vector<10x128xbf16>
    %cst = arith.constant dense<0.000000e+00> : vector<8x128xf32>
    %3 = tpu.matmul %1, %2, %cst {dimension_numbers = #tpu.dot_dimension_numbers<[1], [0], [0], [1], [0, 0, 1, 1], [], []>} : vector<8x10xbf16>, vector<10x128xbf16>, vector<8x128xf32> -> vector<8x128xf32>
    %c0_3 = arith.constant 0 : index
    %c0_4 = arith.constant 0 : index
    %4 = vector.load %arg3[%c0_3, %c0_4] : memref<1x128xf32, #tpu.memory_space<vmem>>, vector<1x128xf32>
    %5 = vector.broadcast %4 : vector<1x128xf32> to vector<8x128xf32>
    %6 = arith.addf %3, %5 : vector<8x128xf32>
    %cst_5 = arith.constant 0.000000e+00 : f32
    %7 = vector.broadcast %cst_5 : f32 to vector<8x128xf32>
    %8 = arith.cmpf ogt, %6, %7 : vector<8x128xf32>
    %cst_6 = arith.constant 2.000000e-01 : f32
    %9 = vector.broadcast %cst_6 : f32 to vector<8x128xf32>
    %10 = arith.mulf %9, %6 : vector<8x128xf32>
    %11 = arith.select %8, %6, %10 : vector<8x128xi1>, vector<8x128xf32>
    %12 = arith.truncf %11 : vector<8x128xf32> to vector<8x128xbf16>
    %c0_7 = arith.constant 0 : index
    %c0_8 = arith.constant 0 : index
    %13 = vector.load %arg4[%c0_7, %c0_8] : memref<128x128xbf16, #tpu.memory_space<vmem>>, vector<128x128xbf16>
    %cst_9 = arith.constant dense<0.000000e+00> : vector<8x128xf32>
    %14 = tpu.matmul %12, %13, %cst_9 {dimension_numbers = #tpu.dot_dimension_numbers<[1], [0], [0], [1], [0, 0, 1, 1], [], []>} : vector<8x128xbf16>, vector<128x128xbf16>, vector<8x128xf32> -> vector<8x128xf32>
    %c0_10 = arith.constant 0 : index
    %c0_11 = arith.constant 0 : index
    %15 = vector.load %arg5[%c0_10, %c0_11] : memref<1x128xf32, #tpu.memory_space<vmem>>, vector<1x128xf32>
    %16 = vector.broadcast %15 : vector<1x128xf32> to vector<8x128xf32>
    %17 = arith.addf %14, %16 : vector<8x128xf32>
    %cst_12 = arith.constant 0.000000e+00 : f32
    %18 = vector.broadcast %cst_12 : f32 to vector<8x128xf32>
    %19 = arith.cmpf ogt, %17, %18 : vector<8x128xf32>
    %cst_13 = arith.constant 2.000000e-01 : f32
    %20 = vector.broadcast %cst_13 : f32 to vector<8x128xf32>
    %21 = arith.mulf %20, %17 : vector<8x128xf32>
    %22 = arith.select %19, %17, %21 : vector<8x128xi1>, vector<8x128xf32>
    %23 = arith.truncf %22 : vector<8x128xf32> to vector<8x128xbf16>
    %c0_14 = arith.constant 0 : index
    %c0_15 = arith.constant 0 : index
    %24 = vector.load %arg6[%c0_14, %c0_15] : memref<128x128xbf16, #tpu.memory_space<vmem>>, vector<128x128xbf16>
    %cst_16 = arith.constant dense<0.000000e+00> : vector<8x128xf32>
    %25 = tpu.matmul %23, %24, %cst_16 {dimension_numbers = #tpu.dot_dimension_numbers<[1], [0], [0], [1], [0, 0, 1, 1], [], []>} : vector<8x128xbf16>, vector<128x128xbf16>, vector<8x128xf32> -> vector<8x128xf32>
    %c0_17 = arith.constant 0 : index
    %c0_18 = arith.constant 0 : index
    %26 = vector.load %arg7[%c0_17, %c0_18] : memref<1x128xf32, #tpu.memory_space<vmem>>, vector<1x128xf32>
    %27 = vector.broadcast %26 : vector<1x128xf32> to vector<8x128xf32>
    %28 = arith.addf %25, %27 : vector<8x128xf32>
    %cst_19 = arith.constant 0.000000e+00 : f32
    %29 = vector.broadcast %cst_19 : f32 to vector<8x128xf32>
    %30 = arith.cmpf ogt, %28, %29 : vector<8x128xf32>
    %cst_20 = arith.constant 2.000000e-01 : f32
    %31 = vector.broadcast %cst_20 : f32 to vector<8x128xf32>
    %32 = arith.mulf %31, %28 : vector<8x128xf32>
    %33 = arith.select %30, %28, %32 : vector<8x128xi1>, vector<8x128xf32>
    %c0_21 = arith.constant 0 : index
    %c0_22 = arith.constant 0 : index
    %34 = vector.load %arg8[%c0_21, %c0_22] : memref<1x128xf32, #tpu.memory_space<vmem>>, vector<1x128xf32>
    %35 = vector.broadcast %34 : vector<1x128xf32> to vector<8x128xf32>
    %36 = arith.mulf %33, %35 : vector<8x128xf32>
    %cst_23 = arith.constant dense<0.000000e+00> : vector<8xf32>
    %37 = vector.multi_reduction <add>, %36, %cst_23 [1] : vector<8x128xf32> to vector<8xf32>
    %38 = vector.shape_cast %37 : vector<8xf32> to vector<8x1xf32>
    %c0_24 = arith.constant 0 : index
    %c0_25 = arith.constant 0 : index
    %39 = vector.load %arg9[%c0_24, %c0_25] : memref<1x1xf32, #tpu.memory_space<vmem>>, vector<1x1xf32>
    %40 = vector.broadcast %39 : vector<1x1xf32> to vector<8x1xf32>
    %41 = arith.addf %38, %40 : vector<8x1xf32>
    %c0_26 = arith.constant 0 : index
    %c0_27 = arith.constant 0 : index
    %42 = vector.load %arg10[%c0_26, %c0_27] : memref<8x1xf32, #tpu.memory_space<vmem>>, vector<8x1xf32>
    tpu.vector_store %arg10[%c0_26, %c0_27], %41 {strides = array<i32>} : memref<8x1xf32, #tpu.memory_space<vmem>>, vector<8x1xf32>,
    return
  }
  func.func @transform_0(%arg0: i32) -> (i32, i32) {
    %c0_i32 = arith.constant 0 : i32
    %c0_i32_0 = arith.constant 0 : i32
    return %arg0, %c0_i32 : i32, i32
  }
  func.func @transform_1(%arg0: i32) -> (i32, i32) {
    %c0_i32 = arith.constant 0 : i32
    %c0_i32_0 = arith.constant 0 : i32
    %c0_i32_1 = arith.constant 0 : i32
    return %c0_i32, %c0_i32_0 : i32, i32
  }
  func.func @transform_2(%arg0: i32) -> (i32, i32) {
    %c0_i32 = arith.constant 0 : i32
    %c0_i32_0 = arith.constant 0 : i32
    %c0_i32_1 = arith.constant 0 : i32
    return %c0_i32, %c0_i32_0 : i32, i32
  }
  func.func @transform_3(%arg0: i32) -> (i32, i32) {
    %c0_i32 = arith.constant 0 : i32
    %c0_i32_0 = arith.constant 0 : i32
    %c0_i32_1 = arith.constant 0 : i32
    return %c0_i32, %c0_i32_0 : i32, i32
  }
  func.func @transform_4(%arg0: i32) -> (i32, i32) {
    %c0_i32 = arith.constant 0 : i32
    %c0_i32_0 = arith.constant 0 : i32
    %c0_i32_1 = arith.constant 0 : i32
    return %c0_i32, %c0_i32_0 : i32, i32
  }
  func.func @transform_5(%arg0: i32) -> (i32, i32) {
    %c0_i32 = arith.constant 0 : i32
    %c0_i32_0 = arith.constant 0 : i32
    %c0_i32_1 = arith.constant 0 : i32
    return %c0_i32, %c0_i32_0 : i32, i32
  }
  func.func @transform_6(%arg0: i32) -> (i32, i32) {
    %c0_i32 = arith.constant 0 : i32
    %c0_i32_0 = arith.constant 0 : i32
    %c0_i32_1 = arith.constant 0 : i32
    return %c0_i32, %c0_i32_0 : i32, i32
  }
  func.func @transform_7(%arg0: i32) -> (i32, i32) {
    %c0_i32 = arith.constant 0 : i32
    %c0_i32_0 = arith.constant 0 : i32
    %c0_i32_1 = arith.constant 0 : i32
    return %c0_i32, %c0_i32_0 : i32, i32
  }
  func.func @transform_8(%arg0: i32) -> (i32, i32) {
    %c0_i32 = arith.constant 0 : i32
    %c0_i32_0 = arith.constant 0 : i32
    %c0_i32_1 = arith.constant 0 : i32
    return %c0_i32, %c0_i32_0 : i32, i32
  }
  func.func @transform_9(%arg0: i32) -> (i32, i32) {
    %c0_i32 = arith.constant 0 : i32
    %c0_i32_0 = arith.constant 0 : i32
    return %arg0, %c0_i32 : i32, i32
  }
}

</mosaic_0001>

<llo_original>
// kernel: generator_forward.1
$region0: #{generator_forward.1}
  #allocation0 [shape = 'u32[]', space=smem, size = 0x4, offset = 0x4, fixed_abs, tag = 'smem constant byte address 0x4 - core index']
  #allocation1 [shape = 'u32[144,128]{1,0:T(1,128)}', space=vmem, size = 0x12000, scoped, tag = 'internal scratch']
  #allocation2 [shape = 'f32[1,1]{1,0:T(1,128)S(1)}', space=vmem, size = 0x200, scoped, tag = 'scoped memory for generator_forward.1']
  %s0 = inlined_call_operand.hbm [shape: f32[8,10], index: 0, kind: input, shape index: {}]
  %s1 = inlined_call_operand.hbm [shape: bf16[10,128], index: 1, kind: input, shape index: {}]
  %s2 = inlined_call_operand.vmem [shape: f32[1,128], index: 2, kind: input, shape index: {}]
  %s3 = inlined_call_operand.hbm [shape: bf16[128,128], index: 3, kind: input, shape index: {}]
  %s4 = inlined_call_operand.vmem [shape: f32[1,128], index: 4, kind: input, shape index: {}]
  %s5 = inlined_call_operand.hbm [shape: bf16[128,128], index: 5, kind: input, shape index: {}]
  %s6 = inlined_call_operand.vmem [shape: f32[1,128], index: 6, kind: input, shape index: {}]
  %s7 = inlined_call_operand.vmem [shape: f32[1,128], index: 7, kind: input, shape index: {}]
  %s8 = inlined_call_operand.<no memory space> [shape: f32[1,1], index: 8, kind: input, shape index: {}]
  %s9 = inlined_call_operand.vmem [shape: f32[8,1], index: 9, kind: output, shape index: {}]
  %s10 = sld [smem:[#allocation0]]
  $region62: #{generator_forward.1} parent=0
    _
  %s12 = ssub.s32 1, %s10
  %s13 = scalar_select 0, %s12, %s10
  %v14 = vstv %s8
  %15 = vst [vmem:[#allocation2] sm:$0x1] %v14
  $region1: #{generator_forward.1} parent=0
    #allocation3 [shape = 'u8[4096]{0}', space=vmem, size = 0x1000, scoped, tag = 'input window, operand 0, single buffered']
    #allocation4 [shape = 's32[1]{0}', space=sflag, size = 0x4, scoped, tag = 'scoped memory for generator_forward.1']
    #allocation5 [shape = 'u8[4096]{0}', space=vmem, size = 0x1000, scoped, tag = 'input window, operand 1, single buffered']
    #allocation6 [shape = 's32[1]{0}', space=sflag, size = 0x4, scoped, tag = 'scoped memory for generator_forward.1']
    #allocation7 [shape = 'u8[32768]{0}', space=vmem, size = 0x8000, scoped, tag = 'input window, operand 3, single buffered']
    #allocation8 [shape = 'u8[32768]{0}', space=vmem, size = 0x8000, scoped, tag = 'input window, operand 5, single buffered']
    #allocation9 [shape = 's32[1]{0}', space=sflag, size = 0x4, scoped, tag = 'scoped memory for generator_forward.1']
    %16 = vsyncpa [#allocation4], 0
    %17 = vsyncpa [#allocation6], 0
    %18 = vsyncpa [#allocation9], 0
    // Predicated region
    $region2: #{generator_forward.1} parent=1 // pred_check
      _
    $region3: #{generator_forward.1} parent=1 // pred_check_branch
      %20 = sbr.rel (0) target = $region5
    $region4: #{generator_forward.1} parent=1 // pred_region
      %s22 = ssub.s32 128, 128
      %23 = vsyncadd [#allocation4], %s22
      %s25 = sshll.u32 [#allocation3], 4
      %s26 = int_to_ptr.vmem [resolvable:$true] %s25
      %28 = dma.hbm_to_vmem [thread:$0]  %s0, 128, %s26, [#allocation4]
    $region5: #{generator_forward.1} parent=1 // pred_fallthru
      _
    // Predicated region
    $region6: #{generator_forward.1} parent=1 // pred_check
      _
    $region7: #{generator_forward.1} parent=1 // pred_check_branch
      %30 = sbr.rel (0) target = $region9
    $region8: #{generator_forward.1} parent=1 // pred_region
      %s32 = ssub.s32 128, 128
      %33 = vsyncadd [#allocation6], %s32
      %s34 = sshll.u32 [#allocation5], 4
      %s35 = int_to_ptr.vmem [resolvable:$true] %s34
      %40 = dma.hbm_to_vmem [thread:$0]  %s1, 128, %s35, [#allocation6], 64, 64, 4
    $region9: #{generator_forward.1} parent=1 // pred_fallthru
      _
    // Predicated region
    $region10: #{generator_forward.1} parent=1 // pred_check
      _
    $region11: #{generator_forward.1} parent=1 // pred_check_branch
      %42 = sbr.rel (0) target = $region13
    $region12: #{generator_forward.1} parent=1 // pred_region
      _
    $region13: #{generator_forward.1} parent=1 // pred_fallthru
      _
    // Predicated region
    $region14: #{generator_forward.1} parent=1 // pred_check
      _
    $region15: #{generator_forward.1} parent=1 // pred_check_branch
      %44 = sbr.rel (0) target = $region17
    $region16: #{generator_forward.1} parent=1 // pred_region
      %s46 = ssub.s32 1024, 1024
      %47 = vsyncadd [#allocation6], %s46
      %s48 = sshll.u32 [#allocation7], 4
      %s49 = int_to_ptr.vmem [resolvable:$true] %s48
      %54 = dma.hbm_to_vmem [thread:$0]  %s3, 1024, %s49, [#allocation6], 64, 64, 4
    $region17: #{generator_forward.1} parent=1 // pred_fallthru
      _
    // Predicated region
    $region18: #{generator_forward.1} parent=1 // pred_check
      _
    $region19: #{generator_forward.1} parent=1 // pred_check_branch
      %56 = sbr.rel (0) target = $region21
    $region20: #{generator_forward.1} parent=1 // pred_region
      _
    $region21: #{generator_forward.1} parent=1 // pred_fallthru
      _
    // Predicated region
    $region22: #{generator_forward.1} parent=1 // pred_check
      _
    $region23: #{generator_forward.1} parent=1 // pred_check_branch
      %58 = sbr.rel (0) target = $region25
    $region24: #{generator_forward.1} parent=1 // pred_region
      %s60 = ssub.s32 1024, 1024
      %61 = vsyncadd [#allocation9], %s60
      %s62 = sshll.u32 [#allocation8], 4
      %s63 = int_to_ptr.vmem [resolvable:$true] %s62
      %68 = dma.hbm_to_vmem [thread:$0]  %s5, 1024, %s63, [#allocation9], 64, 64, 4
    $region25: #{generator_forward.1} parent=1 // pred_fallthru
      _
    // Predicated region
    $region26: #{generator_forward.1} parent=1 // pred_check
      _
    $region27: #{generator_forward.1} parent=1 // pred_check_branch
      %70 = sbr.rel (0) target = $region29
    $region28: #{generator_forward.1} parent=1 // pred_region
      _
    $region29: #{generator_forward.1} parent=1 // pred_fallthru
      _
    // Predicated region
    $region30: #{generator_forward.1} parent=1 // pred_check
      _
    $region31: #{generator_forward.1} parent=1 // pred_check_branch
      %72 = sbr.rel (0) target = $region33
    $region32: #{generator_forward.1} parent=1 // pred_region
      _
    $region33: #{generator_forward.1} parent=1 // pred_fallthru
      _
    // Predicated region
    $region34: #{generator_forward.1} parent=1 // pred_check
      _
    $region35: #{generator_forward.1} parent=1 // pred_check_branch
      %74 = sbr.rel (0) target = $region37
    $region36: #{generator_forward.1} parent=1 // pred_region
      _
    $region37: #{generator_forward.1} parent=1 // pred_fallthru
      _
    // Predicated region
    $region38: #{generator_forward.1} parent=1 // pred_check
      _
    $region39: #{generator_forward.1} parent=1 // pred_check_branch
      %76 = sbr.rel (0) target = $region41
    $region40: #{generator_forward.1} parent=1 // pred_region
      %77 = dma.done [#allocation4], 128
    $region41: #{generator_forward.1} parent=1 // pred_fallthru
      _
    // Predicated region
    $region42: #{generator_forward.1} parent=1 // pred_check
      _
    $region43: #{generator_forward.1} parent=1 // pred_check_branch
      %79 = sbr.rel (0) target = $region45
    $region44: #{generator_forward.1} parent=1 // pred_region
      %80 = dma.done [#allocation6], 128
    $region45: #{generator_forward.1} parent=1 // pred_fallthru
      _
    // Predicated region
    $region46: #{generator_forward.1} parent=1 // pred_check
      _
    $region47: #{generator_forward.1} parent=1 // pred_check_branch
      %82 = sbr.rel (0) target = $region49
    $region48: #{generator_forward.1} parent=1 // pred_region
      %83 = dma.done [#allocation6], 1024
    $region49: #{generator_forward.1} parent=1 // pred_fallthru
      _
    // Predicated region
    $region50: #{generator_forward.1} parent=1 // pred_check
      _
    $region51: #{generator_forward.1} parent=1 // pred_check_branch
      %85 = sbr.rel (0) target = $region53
    $region52: #{generator_forward.1} parent=1 // pred_region
      %86 = dma.done [#allocation9], 1024
    $region53: #{generator_forward.1} parent=1 // pred_fallthru
      _
    %v88 = vld [vmem:[#allocation3] sm:$0xff]
    %v89 = vpack.c.bf16 %v88, %v88
    %v90 = vld [vmem:[#allocation5] sm:$0xf]
    %v91 = vld [vmem:[#allocation5 + $0x4] sm:$0x1]
    %v92 = vld [vmem:[%s2] sm:$0x1]
    %v94 = vlaneseq
    %v95 = vshrl.u32 %v94, 7
    %v96 = vsub.s32 0, %v95
    %v97 = vrot.slane %v92, %v96
    %v101 = vunpack.c.l.b16 %v90
    %v102 = vunpack.c.l.b16 %v91
    %v103 = vpack.c.b16 %v102, %v101
    %vm104 = vcmask 80896
    %v106 = vsel %vm104, %v89, 0
    %vm108 = vcmask 1044480
    %v110 = vsel %vm108, %v103, 0
    %112 = vmatprep.subr.bf16.mxu0 0
    %113 = vmatpush1.bf16.msra.mxu0 0
    %114 = vmatprep.subr.bf16.mxu0 0
    %115 = vmatpush1.bf16.msra.mxu0 0
    %116 = vmatprep.subr.bf16.mxu0 0
    %117 = vmatpush1.bf16.msra.mxu0 0
    %118 = vmatprep.subr.bf16.mxu0 0
    %119 = vmatpush1.bf16.msra.mxu0 0
    %120 = vmatprep.subr.bf16.mxu0 0
    %121 = vmatpush1.bf16.msra.mxu0 0
    %122 = vmatprep.subr.bf16.mxu0 0
    %123 = vmatpush1.bf16.msra.mxu0 0
    %124 = vmatprep.subr.bf16.mxu0 0
    %125 = vmatpush1.bf16.msra.mxu0 0
    %126 = vmatprep.subr.bf16.mxu0 0
    %127 = vmatpush1.bf16.msra.mxu0 %v110
    %128 = vmatprep.subr.bf16.mxu0 0
    %129 = vmatpush2.bf16.msra.mxu0 0
    %130 = vmatprep.subr.bf16.mxu0 0
    %131 = vmatpush2.bf16.msra.mxu0 0
    %132 = vmatprep.subr.bf16.mxu0 0
    %133 = vmatpush2.bf16.msra.mxu0 0
    %134 = vmatprep.subr.bf16.mxu0 0
    %135 = vmatpush2.bf16.msra.mxu0 0
    %136 = vmatprep.subr.bf16.mxu0 0
    %137 = vmatpush2.bf16.msra.mxu0 0
    %138 = vmatprep.subr.bf16.mxu0 0
    %139 = vmatpush2.bf16.msra.mxu0 0
    %140 = vmatprep.subr.bf16.mxu0 0
    %141 = vmatpush2.bf16.msra.mxu0 0
    %142 = vmatprep.subr.bf16.mxu0 0
    %143 = vmatpush2.bf16.msra.mxu0 0
    %144 = vmatprep.mubr.bf16.mxu0 0
    %145 = vmatmul.mubr.bf16.gmra.mxu0 %v106
    %v146 = vpop.f32.mrf.mxu0
    %v147 = vadd.f32 %v97, %v146
    %v148 = vpop.f32.mrf.mxu0
    %v149 = vpop.f32.mrf.mxu0
    %v150 = vpop.f32.mrf.mxu0
    %151 = vdwg.mxu0
    %vm152 = vcmp.gt.f32.partialorder %v147, 0.0
    %v153 = vmul.f32 %v147, 0.2
    %v154 = vsel %vm152, %v147, %v153
    %v155 = vpack.c.bf16 %v154, %v154
    %v156 = vld [vmem:[#allocation7] sm:$0xf]
    %v157 = vld [vmem:[#allocation7 + $0x4] sm:$0xf]
    %v158 = vld [vmem:[#allocation7 + $0x8] sm:$0xf]
    %v159 = vld [vmem:[#allocation7 + $0xc] sm:$0xf]
    %v160 = vld [vmem:[#allocation7 + $0x10] sm:$0xf]
    %v161 = vld [vmem:[#allocation7 + $0x14] sm:$0xf]
    %v162 = vld [vmem:[#allocation7 + $0x18] sm:$0xf]
    %v163 = vld [vmem:[#allocation7 + $0x1c] sm:$0xf]
    %v164 = vld [vmem:[#allocation7 + $0x20] sm:$0xf]
    %v165 = vld [vmem:[#allocation7 + $0x24] sm:$0xf]
    %v166 = vld [vmem:[#allocation7 + $0x28] sm:$0xf]
    %v167 = vld [vmem:[#allocation7 + $0x2c] sm:$0xf]
    %v168 = vld [vmem:[#allocation7 + $0x30] sm:$0xf]
    %v169 = vld [vmem:[#allocation7 + $0x34] sm:$0xf]
    %v170 = vld [vmem:[#allocation7 + $0x38] sm:$0xf]
    %v171 = vld [vmem:[#allocation7 + $0x3c] sm:$0xf]
    %v172 = vld [vmem:[%s4] sm:$0x1]
    %v174 = vlaneseq
    %v175 = vshrl.u32 %v174, 7
    %v176 = vsub.s32 0, %v175
    %v177 = vrot.slane %v172, %v176
    %v195 = vunpack.c.l.b16 %v156
    %v196 = vunpack.c.l.b16 %v157
    %v197 = vunpack.c.l.b16 %v158
    %v198 = vunpack.c.l.b16 %v159
    %v199 = vunpack.c.l.b16 %v160
    %v200 = vunpack.c.l.b16 %v161
    %v201 = vunpack.c.l.b16 %v162
    %v202 = vunpack.c.l.b16 %v163
    %v203 = vunpack.c.l.b16 %v164
    %v204 = vunpack.c.l.b16 %v165
    %v205 = vunpack.c.l.b16 %v166
    %v206 = vunpack.c.l.b16 %v167
    %v207 = vunpack.c.l.b16 %v168
    %v208 = vunpack.c.l.b16 %v169
    %v209 = vunpack.c.l.b16 %v170
    %v210 = vunpack.c.l.b16 %v171
    %v211 = vpack.c.b16 %v196, %v195
    %v212 = vpack.c.b16 %v198, %v197
    %v213 = vpack.c.b16 %v200, %v199
    %v214 = vpack.c.b16 %v202, %v201
    %v215 = vpack.c.b16 %v204, %v203
    %v216 = vpack.c.b16 %v206, %v205
    %v217 = vpack.c.b16 %v208, %v207
    %v218 = vpack.c.b16 %v210, %v209
    %227 = vmatprep.subr.bf16.mxu0 0
    %228 = vmatpush1.bf16.msra.mxu0 %v218
    %229 = vmatprep.subr.bf16.mxu0 0
    %230 = vmatpush1.bf16.msra.mxu0 %v217
    %231 = vmatprep.subr.bf16.mxu0 0
    %232 = vmatpush1.bf16.msra.mxu0 %v216
    %233 = vmatprep.subr.bf16.mxu0 0
    %234 = vmatpush1.bf16.msra.mxu0 %v215
    %235 = vmatprep.subr.bf16.mxu0 0
    %236 = vmatpush1.bf16.msra.mxu0 %v214
    %237 = vmatprep.subr.bf16.mxu0 0
    %238 = vmatpush1.bf16.msra.mxu0 %v213
    %239 = vmatprep.subr.bf16.mxu0 0
    %240 = vmatpush1.bf16.msra.mxu0 %v212
    %241 = vmatprep.subr.bf16.mxu0 0
    %242 = vmatpush1.bf16.msra.mxu0 %v211
    %243 = vmatprep.subr.bf16.mxu0 0
    %244 = vmatpush2.bf16.msra.mxu0 0
    %245 = vmatprep.subr.bf16.mxu0 0
    %246 = vmatpush2.bf16.msra.mxu0 0
    %247 = vmatprep.subr.bf16.mxu0 0
    %248 = vmatpush2.bf16.msra.mxu0 0
    %249 = vmatprep.subr.bf16.mxu0 0
    %250 = vmatpush2.bf16.msra.mxu0 0
    %251 = vmatprep.subr.bf16.mxu0 0
    %252 = vmatpush2.bf16.msra.mxu0 0
    %253 = vmatprep.subr.bf16.mxu0 0
    %254 = vmatpush2.bf16.msra.mxu0 0
    %255 = vmatprep.subr.bf16.mxu0 0
    %256 = vmatpush2.bf16.msra.mxu0 0
    %257 = vmatprep.subr.bf16.mxu0 0
    %258 = vmatpush2.bf16.msra.mxu0 0
    %259 = vmatprep.mubr.bf16.mxu0 0
    %260 = vmatmul.mubr.bf16.gmra.mxu0 %v155
    %v261 = vpop.f32.mrf.mxu0
    %v262 = vadd.f32 %v177, %v261
    %v263 = vpop.f32.mrf.mxu0
    %v264 = vpop.f32.mrf.mxu0
    %v265 = vpop.f32.mrf.mxu0
    %266 = vdwg.mxu0
    %vm267 = vcmp.gt.f32.partialorder %v262, 0.0
    %v268 = vmul.f32 %v262, 0.2
    %v269 = vsel %vm267, %v262, %v268
    %v270 = vpack.c.bf16 %v269, %v269
    %v271 = vld [vmem:[#allocation8] sm:$0xf]
    %v272 = vld [vmem:[#allocation8 + $0x4] sm:$0xf]
    %v273 = vld [vmem:[#allocation8 + $0x8] sm:$0xf]
    %v274 = vld [vmem:[#allocation8 + $0xc] sm:$0xf]
    %v275 = vld [vmem:[#allocation8 + $0x10] sm:$0xf]
    %v276 = vld [vmem:[#allocation8 + $0x14] sm:$0xf]
    %v277 = vld [vmem:[#allocation8 + $0x18] sm:$0xf]
    %v278 = vld [vmem:[#allocation8 + $0x1c] sm:$0xf]
    %v279 = vld [vmem:[#allocation8 + $0x20] sm:$0xf]
    %v280 = vld [vmem:[#allocation8 + $0x24] sm:$0xf]
    %v281 = vld [vmem:[#allocation8 + $0x28] sm:$0xf]
    %v282 = vld [vmem:[#allocation8 + $0x2c] sm:$0xf]
    %v283 = vld [vmem:[#allocation8 + $0x30] sm:$0xf]
    %v284 = vld [vmem:[#allocation8 + $0x34] sm:$0xf]
    %v285 = vld [vmem:[#allocation8 + $0x38] sm:$0xf]
    %v286 = vld [vmem:[#allocation8 + $0x3c] sm:$0xf]
    %v287 = vld [vmem:[%s6] sm:$0x1]
    %v289 = vlaneseq
    %v290 = vshrl.u32 %v289, 7
    %v291 = vsub.s32 0, %v290
    %v292 = vrot.slane %v287, %v291
    %v310 = vunpack.c.l.b16 %v271
    %v311 = vunpack.c.l.b16 %v272
    %v312 = vunpack.c.l.b16 %v273
    %v313 = vunpack.c.l.b16 %v274
    %v314 = vunpack.c.l.b16 %v275
    %v315 = vunpack.c.l.b16 %v276
    %v316 = vunpack.c.l.b16 %v277
    %v317 = vunpack.c.l.b16 %v278
    %v318 = vunpack.c.l.b16 %v279
    %v319 = vunpack.c.l.b16 %v280
    %v320 = vunpack.c.l.b16 %v281
    %v321 = vunpack.c.l.b16 %v282
    %v322 = vunpack.c.l.b16 %v283
    %v323 = vunpack.c.l.b16 %v284
    %v324 = vunpack.c.l.b16 %v285
    %v325 = vunpack.c.l.b16 %v286
    %v326 = vpack.c.b16 %v311, %v310
    %v327 = vpack.c.b16 %v313, %v312
    %v328 = vpack.c.b16 %v315, %v314
    %v329 = vpack.c.b16 %v317, %v316
    %v330 = vpack.c.b16 %v319, %v318
    %v331 = vpack.c.b16 %v321, %v320
    %v332 = vpack.c.b16 %v323, %v322
    %v333 = vpack.c.b16 %v325, %v324
    %342 = vmatprep.subr.bf16.mxu0 0
    %343 = vmatpush1.bf16.msra.mxu0 %v333
    %344 = vmatprep.subr.bf16.mxu0 0
    %345 = vmatpush1.bf16.msra.mxu0 %v332
    %346 = vmatprep.subr.bf16.mxu0 0
    %347 = vmatpush1.bf16.msra.mxu0 %v331
    %348 = vmatprep.subr.bf16.mxu0 0
    %349 = vmatpush1.bf16.msra.mxu0 %v330
    %350 = vmatprep.subr.bf16.mxu0 0
    %351 = vmatpush1.bf16.msra.mxu0 %v329
    %352 = vmatprep.subr.bf16.mxu0 0
    %353 = vmatpush1.bf16.msra.mxu0 %v328
    %354 = vmatprep.subr.bf16.mxu0 0
    %355 = vmatpush1.bf16.msra.mxu0 %v327
    %356 = vmatprep.subr.bf16.mxu0 0
    %357 = vmatpush1.bf16.msra.mxu0 %v326
    %358 = vmatprep.subr.bf16.mxu0 0
    %359 = vmatpush2.bf16.msra.mxu0 0
    %360 = vmatprep.subr.bf16.mxu0 0
    %361 = vmatpush2.bf16.msra.mxu0 0
    %362 = vmatprep.subr.bf16.mxu0 0
    %363 = vmatpush2.bf16.msra.mxu0 0
    %364 = vmatprep.subr.bf16.mxu0 0
    %365 = vmatpush2.bf16.msra.mxu0 0
    %366 = vmatprep.subr.bf16.mxu0 0
    %367 = vmatpush2.bf16.msra.mxu0 0
    %368 = vmatprep.subr.bf16.mxu0 0
    %369 = vmatpush2.bf16.msra.mxu0 0
    %370 = vmatprep.subr.bf16.mxu0 0
    %371 = vmatpush2.bf16.msra.mxu0 0
    %372 = vmatprep.subr.bf16.mxu0 0
    %373 = vmatpush2.bf16.msra.mxu0 0
    %374 = vmatprep.mubr.bf16.mxu0 0
    %375 = vmatmul.mubr.bf16.gmra.mxu0 %v270
    %v376 = vpop.f32.mrf.mxu0
    %v377 = vadd.f32 %v292, %v376
    %v378 = vpop.f32.mrf.mxu0
    %v379 = vpop.f32.mrf.mxu0
    %v380 = vpop.f32.mrf.mxu0
    %381 = vdwg.mxu0
    %vm382 = vcmp.gt.f32.partialorder %v377, 0.0
    %v383 = vmul.f32 %v377, 0.2
    %v384 = vsel %vm382, %v377, %v383
    %v385 = vld [vmem:[%s7] sm:$0x1]
    %v387 = vlaneseq
    %v388 = vshrl.u32 %v387, 7
    %v389 = vsub.s32 0, %v388
    %v390 = vrot.slane %v385, %v389
    %v392 = vmul.f32 %v384, %v390
    %393 = vadd.xlane.f32.xlu0 %v392
    %v394 = vpop.xlane.xlu0 %393
    %v395 = vld [vmem:[#allocation2] sm:$0x1]
    %v397 = vlaneseq
    %v398 = vshrl.u32 %v397, 7
    %v399 = vsub.s32 0, %v398
    %v400 = vrot.slane %v395, %v399
    %v402 = vadd.f32 %v394, %v400
    %vm403 = vcmask 7168
    %404 = vst.msk [vmem:[%s9] sm:$0xff] %vm403, %v402
    // Predicated region
    $region54: #{generator_forward.1} parent=1 // pred_check
      _
    $region55: #{generator_forward.1} parent=1 // pred_check_branch
      %406 = sbr.rel (0) target = $region57
    $region56: #{generator_forward.1} parent=1 // pred_region
      _
    $region57: #{generator_forward.1} parent=1 // pred_fallthru
      _
    // Predicated region
    $region58: #{generator_forward.1} parent=1 // pred_check
      _
    $region59: #{generator_forward.1} parent=1 // pred_check_branch
      %408 = sbr.rel (0) target = $region61
    $region60: #{generator_forward.1} parent=1 // pred_region
      _
    $region61: #{generator_forward.1} parent=1 // pred_fallthru
      _
    %409 = vsyncpa [#allocation4], 1
    %410 = vsyncpa [#allocation6], 1
    %411 = vsyncpa [#allocation9], 1

</llo_original>
